<compile_context>
chip_gen: v7x
topology: tpu7x:2x2x1
jax: 0.10.0
libtpu: 0.0.40
codegen_flags: <defaults>
</compile_context>

<pallas_src>
import functools
import math

import jax
import jax.numpy as jnp
from jax.experimental import pallas as pl
from jax.experimental.pallas import tpu as pltpu

_LANE = 128


def _vmem_budgets():
    """Return (working-set budget, vmem_limit_bytes) scaled to this chip."""
    try:
        cap = pltpu.get_tpu_info().vmem_capacity_bytes
    except Exception:
        cap = 128 * 1024 * 1024
    if cap <= 64 * 1024 * 1024:                       # v7x: 64 MiB physical
        return 14 * 1024 * 1024, 30 * 1024 * 1024
    return 48 * 1024 * 1024, 96 * 1024 * 1024         # v5e / v6e: 128 MiB


def _channel_kernel(params_ref, *refs, apply_fading):
    """params_ref: SMEM (2,) f32 = [inv_snr_lin, inv_k].

    refs = (z_ref, eps_ref, [h_ref,] o_ref); z/eps/o blocks are (TB, R, 128).
    h_ref (if present) may be (TB,1,1), (TB,R,1) or (TB,R,128) and is
    broadcast against z inside the kernel, so compact fading modes never
    materialize a full-size h stream in HBM.
    """
    if apply_fading:
        z_ref, eps_ref, h_ref, o_ref = refs
    else:
        z_ref, eps_ref, o_ref = refs
        h_ref = None

    inv_snr_lin = params_ref[0]
    inv_k = params_ref[1]

    z = z_ref[...]                                    # (TB, R, L) native dtype
    zf = z.astype(jnp.float32)
    # per-image signal power; padded lanes are zero so they do not contribute,
    # and inv_k uses the *real* K, matching torch's sum(z^2)/k.
    sig_pwr = jnp.sum(zf * zf, axis=(1, 2), keepdims=True) * inv_k
    noise_std = jnp.sqrt(sig_pwr * inv_snr_lin)       # (TB, 1, 1) f32

    # bf16 inputs keep the elementwise combine in bf16 (v6e/v7x native VPU);
    # everything else computes in f32.
    cdt = z.dtype if z.dtype == jnp.bfloat16 else jnp.float32
    y = z.astype(cdt)
    if apply_fading:
        y = y * h_ref[...].astype(cdt)
    out = y + eps_ref[...].astype(cdt) * noise_std.astype(cdt)
    o_ref[...] = out.astype(o_ref.dtype)


def _run_channel_kernel(z3, eps3, h_arg, params):
    """z3/eps3: (B, R, 128).  h_arg: None or (B, hr, hl) f32.  params: (2,) f32."""
    B, R, L = z3.shape
    apply_fading = h_arg is not None
    itemsize = z3.dtype.itemsize

    budget, vmem_limit = _vmem_budgets()
    # double-buffered IO streams (z in, eps in, out) + ~3 full-tile f32
    # intermediates that live inside the kernel body.
    row_bytes = 2 * 3 * R * L * itemsize + 3 * R * L * 4
    if apply_fading:
        row_bytes += 2 * h_arg.shape[1] * h_arg.shape[2] * h_arg.dtype.itemsize

    tb = max(1, min(B, budget // max(row_bytes, 1)))
    if B > 1:
        # keep >= 2 (ideally 4+) grid steps so "parallel" can shard across
        # both v7x TensorCores instead of collapsing to a single step.
        tb = min(tb, max(1, (B + 3) // 4))
    while B % tb:                                      # clean, unmasked blocks
        tb -= 1

    tile_spec = pl.BlockSpec((tb, R, L), lambda i: (i, 0, 0))
    in_specs = [
        pl.BlockSpec(memory_space=pltpu.MemorySpace.SMEM),   # params scalars
        tile_spec,                                           # z
        tile_spec,                                           # eps
    ]
    args = [params, z3, eps3]
    if apply_fading:
        hr, hl = h_arg.shape[1], h_arg.shape[2]
        in_specs.append(pl.BlockSpec((tb, hr, hl), lambda i: (i, 0, 0)))
        args.append(h_arg)

    kernel = functools.partial(_channel_kernel, apply_fading=apply_fading)
    return pl.pallas_call(
        kernel,
        out_shape=jax.ShapeDtypeStruct((B, R, L), z3.dtype),
        grid_spec=pltpu.PrefetchScalarGridSpec(
            num_scalar_prefetch=0,
            grid=(B // tb,),
            in_specs=in_specs,
            out_specs=tile_spec,
        ),
        compiler_params=pltpu.CompilerParams(
            dimension_semantics=("parallel",),
            vmem_limit_bytes=vmem_limit,
        ),
    )(*args)


def _fading_shape(shape, fading_mode):
    B, C, H, W = shape
    if fading_mode == "per_batch":
        return (1, 1, 1, 1)
    if fading_mode == "per_image":
        return (B, 1, 1, 1)
    if fading_mode == "per_channel":
        return (B, C, 1, 1)
    if fading_mode == "per_pixel":
        return (B, C, H, W)
    raise ValueError("Invalid fading mode")


def _pad_flatten(x4, B, K, Kp):
    """(B,C,H,W) -> (B, Kp//128, 128); zero-pads the tail only when needed."""
    x = x4.reshape(B, K)
    if Kp != K:
        x = jnp.pad(x, ((0, 0), (0, Kp - K)))
    return x.reshape(B, Kp // _LANE, _LANE)


def channel_forward(z_hat, key, *, channel_type="AWGN", snr=20,
                    rician_k=3.0, nakagami_m=1.0, fading_mode="per_image"):
    """JAX/Pallas equivalent of Channel.forward (non-markov modes)."""
    if channel_type not in ("AWGN", "Rayleigh", "Rician", "Nakagami"):
        raise ValueError("Unknown type of channel")
    if fading_mode == "markov":
        # TODO(synk): markov fading is a serial host-side Markov-chain walk.
        raise NotImplementedError("fading_mode='markov' not implemented")
    if fading_mode not in ("per_batch", "per_image", "per_channel", "per_pixel"):
        raise ValueError("Invalid fading mode")

    if z_hat.ndim == 3:
        z_hat = z_hat[None, ...]
    elif z_hat.ndim != 4:
        raise ValueError("Input tensor must be 3D or 4D")
    B, C, H, W = z_hat.shape
    K = C * H * W
    Kp = ((K + _LANE - 1) // _LANE) * _LANE
    R = Kp // _LANE

    key_eps, key_fade = jax.random.split(key)

    # AWGN term (torch's randn_like), streamed through the kernel.
    eps3 = jax.random.normal(key_eps, (B, R, _LANE), dtype=z_hat.dtype)

    # Fading coefficient h: tiny host-side draw, kept compact where possible.
    if channel_type == "AWGN":
        h_arg = None
    else:
        fshape = _fading_shape((B, C, H, W), fading_mode)
        if channel_type == "Rayleigh":
            h = jax.random.normal(key_fade, fshape, dtype=jnp.float32)
        elif channel_type == "Rician":
            kk = float(rician_k)
            s = math.sqrt(kk / (kk + 1.0))
            sigma = math.sqrt(1.0 / (2.0 * (kk + 1.0)))
            h = s + sigma * jax.random.normal(key_fade, fshape, dtype=jnp.float32)
        else:  # Nakagami
            m = float(nakagami_m)
            h_mag_sq = jax.random.gamma(key_fade, m, fshape,
                                        dtype=jnp.float32) * (1.0 / m)
            h = jnp.sqrt(h_mag_sq)

        if fading_mode in ("per_batch", "per_image"):
            h_arg = jnp.broadcast_to(h.reshape(-1, 1, 1), (B, 1, 1))
        elif fading_mode == "per_channel" and (H * W) % _LANE == 0:
            # one value per 128-lane row -> still a tiny (B, R, 1) stream
            h_arg = jnp.repeat(h.reshape(B, C), (H * W) // _LANE,
                               axis=1).reshape(B, R, 1)
        else:
            h_full = jnp.broadcast_to(h, (B, C, H, W)).astype(jnp.float32)
            h_arg = _pad_flatten(h_full, B, K, Kp)

    z3 = _pad_flatten(z_hat, B, K, Kp)                 # native dtype preserved
    params = jnp.array([10.0 ** (-float(snr) / 10.0), 1.0 / float(K)],
                       dtype=jnp.float32)
    out3 = _run_channel_kernel(z3, eps3, h_arg, params)

    if Kp == K:
        out = out3.reshape(B, C, H, W)                 # free reshape, no copies
    else:
        out = out3.reshape(B, Kp)[:, :K].reshape(B, C, H, W)
    # match the torch module: squeeze the batch dim when it is 1
    return out[0] if out.shape[0] == 1 else out


if __name__ == "__main__":
    key = jax.random.PRNGKey(0)
    k_in, k_chan = jax.random.split(key)

    B, C, H, W = 2, 4, 16, 16
    snr = 20
    snr_lin_inv = 10.0 ** (-snr / 10.0)
    z = jax.random.normal(k_in, (B, C, H, W), dtype=jnp.float32)
    sig_pwr = jnp.mean(z ** 2, axis=(1, 2, 3))                       # (B,)

    def residual_ok(out, faded):
        """Noise residual power must match sig_pwr * 10^(-snr/10) (statistical)."""
        res = (out - faded).astype(jnp.float32)
        noi_pwr = jnp.mean(res ** 2, axis=(1, 2, 3))
        ratio = noi_pwr / (sig_pwr * snr_lin_inv)
        return bool(jnp.all(jnp.abs(ratio - 1.0) < 0.35))

    # --- AWGN (no fading stream) ---------------------------------------------
    out_awgn = jax.block_until_ready(
        channel_forward(z, k_chan, channel_type="AWGN", snr=snr))
    assert out_awgn.shape == z.shape and out_awgn.dtype == z.dtype
    assert residual_ok(out_awgn, z)

    # --- Rayleigh, per_image (compact (B,1,1) fading) ------------------------
    out_ray = jax.block_until_ready(
        channel_forward(z, k_chan, channel_type="Rayleigh", snr=snr,
                        fading_mode="per_image"))
    _, kf = jax.random.split(k_chan)
    h_ray = jax.random.normal(kf, (B, 1, 1, 1), dtype=jnp.float32)
    assert out_ray.shape == z.shape
    assert residual_ok(out_ray, z * h_ray)

    # --- Nakagami, per_channel (row-wise (B,R,1) fading) ---------------------
    out_nak = jax.block_until_ready(
        channel_forward(z, k_chan, channel_type="Nakagami", snr=snr,
                        nakagami_m=1.0, fading_mode="per_channel"))
    h_nak = jnp.sqrt(jax.random.gamma(kf, 1.0, (B, C, 1, 1), dtype=jnp.float32))
    assert out_nak.shape == z.shape
    assert residual_ok(out_nak, z * h_nak)

    # --- Rician, per_pixel (full-size fading stream) -------------------------
    out_ric = jax.block_until_ready(
        channel_forward(z, k_chan, channel_type="Rician", snr=snr,
                        rician_k=3.0, fading_mode="per_pixel"))
    kk = 3.0
    s = math.sqrt(kk / (kk + 1.0))
    sigma = math.sqrt(1.0 / (2.0 * (kk + 1.0)))
    h_ric = s + sigma * jax.random.normal(kf, (B, C, H, W), dtype=jnp.float32)
    assert out_ric.shape == z.shape
    assert residual_ok(out_ric, z * h_ric)

    print("KERNEL_OK")
</pallas_src>

<mosaic_0001>
module attributes {stable_mosaic.version = 11 : i64} {
  func.func @_channel_kernel(%arg0: i32, %arg1: memref<2xf32, #tpu.memory_space<smem>>, %arg2: memref<1x8x128xf32, #tpu.memory_space<vmem>>, %arg3: memref<1x8x128xf32, #tpu.memory_space<vmem>>, %arg4: memref<1x8x128xf32, #tpu.memory_space<vmem>>) attributes {dimension_semantics = [#tpu.dimension_semantics<parallel>], iteration_bounds = array<i64: 2>, scalar_prefetch = 0 : i64, scratch_operands = 0 : i64, tpu.core_type = #tpu.core_type<tc>, window_params = [{transform_indices = @transform_0, window_bounds = array<i64: 2>}, {transform_indices = @transform_1, window_bounds = array<i64: 1, 8, 128>}, {transform_indices = @transform_2, window_bounds = array<i64: 1, 8, 128>}, {transform_indices = @transform_3, window_bounds = array<i64: 1, 8, 128>}]} {
    %c0 = arith.constant 0 : index
    %0 = memref.load %arg1[%c0] : memref<2xf32, #tpu.memory_space<smem>>
    %c1 = arith.constant 1 : index
    %1 = memref.load %arg1[%c1] : memref<2xf32, #tpu.memory_space<smem>>
    %c0_0 = arith.constant 0 : index
    %c0_1 = arith.constant 0 : index
    %c0_2 = arith.constant 0 : index
    %2 = vector.load %arg2[%c0_0, %c0_1, %c0_2] : memref<1x8x128xf32, #tpu.memory_space<vmem>>, vector<1x8x128xf32>
    %3 = arith.mulf %2, %2 : vector<1x8x128xf32>
    %cst = arith.constant dense<0.000000e+00> : vector<1xf32>
    %4 = vector.multi_reduction <add>, %3, %cst [1, 2] : vector<1x8x128xf32> to vector<1xf32>
    %5 = vector.shape_cast %4 : vector<1xf32> to vector<1x1x1xf32>
    %6 = vector.broadcast %1 : f32 to vector<1x1x1xf32>
    %7 = arith.mulf %5, %6 : vector<1x1x1xf32>
    %8 = vector.broadcast %0 : f32 to vector<1x1x1xf32>
    %9 = arith.mulf %7, %8 : vector<1x1x1xf32>
    %10 = math.sqrt %9 : vector<1x1x1xf32>
    %c0_3 = arith.constant 0 : index
    %c0_4 = arith.constant 0 : index
    %c0_5 = arith.constant 0 : index
    %11 = vector.load %arg3[%c0_3, %c0_4, %c0_5] : memref<1x8x128xf32, #tpu.memory_space<vmem>>, vector<1x8x128xf32>
    %12 = vector.broadcast %10 : vector<1x1x1xf32> to vector<1x8x128xf32>
    %13 = arith.mulf %11, %12 : vector<1x8x128xf32>
    %14 = arith.addf %2, %13 : vector<1x8x128xf32>
    %c0_6 = arith.constant 0 : index
    %c0_7 = arith.constant 0 : index
    %c0_8 = arith.constant 0 : index
    %15 = vector.load %arg4[%c0_6, %c0_7, %c0_8] : memref<1x8x128xf32, #tpu.memory_space<vmem>>, vector<1x8x128xf32>
    tpu.vector_store %arg4[%c0_6, %c0_7, %c0_8], %14 {strides = array<i32>} : memref<1x8x128xf32, #tpu.memory_space<vmem>>, vector<1x8x128xf32>,
    return
  }
  func.func @transform_0(%arg0: i32) -> i32 {
    %c0_i32 = arith.constant 0 : i32
    %c0_i32_0 = arith.constant 0 : i32
    return %c0_i32 : i32
  }
  func.func @transform_1(%arg0: i32) -> (i32, i32, i32) {
    %c0_i32 = arith.constant 0 : i32
    %c0_i32_0 = arith.constant 0 : i32
    %c0_i32_1 = arith.constant 0 : i32
    return %arg0, %c0_i32, %c0_i32_0 : i32, i32, i32
  }
  func.func @transform_2(%arg0: i32) -> (i32, i32, i32) {
    %c0_i32 = arith.constant 0 : i32
    %c0_i32_0 = arith.constant 0 : i32
    %c0_i32_1 = arith.constant 0 : i32
    return %arg0, %c0_i32, %c0_i32_0 : i32, i32, i32
  }
  func.func @transform_3(%arg0: i32) -> (i32, i32, i32) {
    %c0_i32 = arith.constant 0 : i32
    %c0_i32_0 = arith.constant 0 : i32
    %c0_i32_1 = arith.constant 0 : i32
    return %arg0, %c0_i32, %c0_i32_0 : i32, i32, i32
  }
}

</mosaic_0001>

<llo_original>
// kernel: tpu_custom_call.1
$region0: #{tpu_custom_call.1}
  #allocation0 [shape = 'u32[]', space=smem, size = 0x4, offset = 0x4, fixed_abs, tag = 'smem constant byte address 0x4 - core index']
  #allocation1 [shape = 'u32[144,128]{1,0:T(1,128)}', space=vmem, size = 0x12000, scoped, tag = 'internal scratch']
  %s0 = inlined_call_operand.hbm [shape: f32[2], index: 0, kind: input, shape index: {}]
  %s1 = inlined_call_operand.hbm [shape: f32[2,8,128], index: 1, kind: input, shape index: {}]
  %s2 = inlined_call_operand.hbm [shape: f32[2,8,128], index: 2, kind: input, shape index: {}]
  %s3 = inlined_call_operand.hbm [shape: f32[2,8,128], index: 3, kind: output, shape index: {}]
  %s4 = sld [smem:[#allocation0]]
  $region57: #{tpu_custom_call.1} parent=0
    _
  %s6 = ssub.s32 1, %s4
  %s7 = scalar_select 0, %s6, %s4
  $region1: #{tpu_custom_call.1} parent=0
    #allocation2 [shape = 'u8[512]{0}', space=smem, size = 0x200, scoped, tag = 'input window, operand 0, single buffered']
    #allocation3 [shape = 's32[2]{0}', space=sflag, size = 0x8, scoped, tag = 'scoped memory for tpu_custom_call.1']
    #allocation4 [shape = 's32[2]{0}', space=sflag, size = 0x8, scoped, tag = 'scoped memory for tpu_custom_call.1']
    #allocation5 [shape = 's32[2]{0}', space=sflag, size = 0x8, scoped, tag = 'scoped memory for tpu_custom_call.1']
    #allocation6 [shape = 'u8[8192]{0}', space=vmem, size = 0x2000, scoped, tag = 'input window, operand 1']
    #allocation7 [shape = 'u8[8192]{0}', space=vmem, size = 0x2000, scoped, tag = 'input window, operand 2']
    #allocation8 [shape = 's32[2]{0}', space=sflag, size = 0x8, scoped, tag = 'scoped memory for tpu_custom_call.1']
    #allocation9 [shape = 'u8[8192]{0}', space=vmem, size = 0x2000, scoped, tag = 'output window, operand 0']
    %8 = vsyncpa [#allocation5], 0
    %9 = vsyncpa [#allocation3], 0
    %s10 = scalar_lea.sflag [#allocation3], 1
    %11 = vsyncpa %s10, 0
    %12 = vsyncpa [#allocation8], 0
    %s13 = scalar_lea.sflag [#allocation8], 1
    %14 = vsyncpa %s13, 0
    %15 = vsyncpa [#allocation4], 0
    %s16 = scalar_lea.sflag [#allocation4], 1
    %17 = vsyncpa %s16, 0
    loop: start=0, step=1, limit=4
    $region2: #{tpu_custom_call.1} parent=1 // loop_pre_header
      _
    $region3: #{tpu_custom_call.1} parent=1 // loop_header
      %s19 = sphi 0, %s23
      %p20 = scmp.ge.s32.totalorder %s19, 4
      %s27 = sphi 0, %s27
      %s29 = sphi 0, %s27
      %s30 = sphi 0, %s29
      %s44 = sphi 0, %s30
      %s50 = sphi 0, %s52
      %s53 = sphi 0, %s50
      %s54 = sphi 0, %s53
      %s70 = sphi 0, %s54
      %s76 = sphi 0, %s78
      %s79 = sphi 0, %s76
      %s80 = sphi 0, %s79
      %s96 = sphi 0, %s80
      %s102 = sphi 0, %s104
      %s105 = sphi 0, %s102
      %s106 = sphi 0, %s105
      %s122 = sphi 0, %s106
    $region4: #{tpu_custom_call.1} parent=1 // loop_header_branch
      %22 = sbr.rel (%p20) target = $region8
    $region5: #{tpu_custom_call.1} parent=1 // loop_body
      %s24 = ssub.s32 %s19, 1
      %s25 = ssub.s32 %s19, 2
      %s26 = sadd.s32 %s19, 1
      %s28 = sadd.s32 %s27, 1
      %p31 = scmp.eq.s32.totalorder %s19, 1
      %p32 = scmp.ne.s32.totalorder %s27, %s29
      %p33 = scmp.eq.s32.totalorder %s19, 0
      %p34 = por %p32, %p33
      %p35 = scmp.ne.s32.totalorder %s27, %s29
      %p36 = scmp.eq.s32.totalorder %s24, 1
      %p37 = por %p35, %p36
      %p38 = scmp.ne.s32.totalorder %s29, %s30
      %p39 = scmp.eq.s32.totalorder %s24, 0
      %p40 = por %p38, %p39
      %p41 = scmp.ne.s32.totalorder %s29, %s30
      %p42 = scmp.eq.s32.totalorder %s25, 1
      %p43 = por %p41, %p42
      %p45 = scmp.ne.s32.totalorder %s30, %s44
      %p46 = scmp.eq.s32.totalorder %s25, 0
      %p47 = por %p45, %p46
      %s48 = ssub.s32 %s19, %s26
      %p49 = scmp.eq.s32.totalorder %s48, 0
      %s51 = sadd.s32 %s50, 1
      %s52 = scalar_select %p49, %s50, %s51
      %p55 = pneg %p49
      %p56 = scmp.eq.s32.totalorder %s19, 1
      %p57 = por %p55, %p56
      %p58 = scmp.ne.s32.totalorder %s50, %s53
      %p59 = scmp.eq.s32.totalorder %s19, 0
      %p60 = por %p58, %p59
      %p61 = scmp.ne.s32.totalorder %s50, %s53
      %p62 = scmp.eq.s32.totalorder %s24, 1
      %p63 = por %p61, %p62
      %p64 = scmp.ne.s32.totalorder %s53, %s54
      %p65 = scmp.eq.s32.totalorder %s24, 0
      %p66 = por %p64, %p65
      %p67 = scmp.ne.s32.totalorder %s53, %s54
      %p68 = scmp.eq.s32.totalorder %s25, 1
      %p69 = por %p67, %p68
      %p71 = scmp.ne.s32.totalorder %s54, %s70
      %p72 = scmp.eq.s32.totalorder %s25, 0
      %p73 = por %p71, %p72
      %s74 = ssub.s32 %s19, %s26
      %p75 = scmp.eq.s32.totalorder %s74, 0
      %s77 = sadd.s32 %s76, 1
      %s78 = scalar_select %p75, %s76, %s77
      %p81 = pneg %p75
      %p82 = scmp.eq.s32.totalorder %s19, 1
      %p83 = por %p81, %p82
      %p84 = scmp.ne.s32.totalorder %s76, %s79
      %p85 = scmp.eq.s32.totalorder %s19, 0
      %p86 = por %p84, %p85
      %p87 = scmp.ne.s32.totalorder %s76, %s79
      %p88 = scmp.eq.s32.totalorder %s24, 1
      %p89 = por %p87, %p88
      %p90 = scmp.ne.s32.totalorder %s79, %s80
      %p91 = scmp.eq.s32.totalorder %s24, 0
      %p92 = por %p90, %p91
      %p93 = scmp.ne.s32.totalorder %s79, %s80
      %p94 = scmp.eq.s32.totalorder %s25, 1
      %p95 = por %p93, %p94
      %p97 = scmp.ne.s32.totalorder %s80, %s96
      %p98 = scmp.eq.s32.totalorder %s25, 0
      %p99 = por %p97, %p98
      %s100 = ssub.s32 %s19, %s26
      %p101 = scmp.eq.s32.totalorder %s100, 0
      %s103 = sadd.s32 %s102, 1
      %s104 = scalar_select %p101, %s102, %s103
      %p107 = pneg %p101
      %p108 = scmp.eq.s32.totalorder %s19, 1
      %p109 = por %p107, %p108
      %p110 = scmp.ne.s32.totalorder %s102, %s105
      %p111 = scmp.eq.s32.totalorder %s19, 0
      %p112 = por %p110, %p111
      %p113 = scmp.ne.s32.totalorder %s102, %s105
      %p114 = scmp.eq.s32.totalorder %s24, 1
      %p115 = por %p113, %p114
      %p116 = scmp.ne.s32.totalorder %s105, %s106
      %p117 = scmp.eq.s32.totalorder %s24, 0
      %p118 = por %p116, %p117
      %p119 = scmp.ne.s32.totalorder %s105, %s106
      %p120 = scmp.eq.s32.totalorder %s25, 1
      %p121 = por %p119, %p120
      %p123 = scmp.ne.s32.totalorder %s106, %s122
      %p124 = scmp.eq.s32.totalorder %s25, 0
      %p125 = por %p123, %p124
      %p126 = scmp.le.s32.totalorder 1, %s19
      %p127 = scmp.lt.s32.totalorder %s19, 3
      %p128 = pnand %p126, %p127
      %p129 = pneg %p128
      // Predicated region
      $region9: #{tpu_custom_call.1} parent=5 // pred_check
        _
      $region10: #{tpu_custom_call.1} parent=5 // pred_check_branch
        %131 = sbr.rel (%p128) target = $region12
      $region11: #{tpu_custom_call.1} parent=5 // pred_region
        %s132 = ssub.s32 %s19, 1
        // Predicated region
        $region13: #{tpu_custom_call.1} parent=11 // pred_check
          %p133 = pneg %p40
        $region14: #{tpu_custom_call.1} parent=11 // pred_check_branch
          %135 = sbr.rel (%p133) target = $region16
        $region15: #{tpu_custom_call.1} parent=11 // pred_region
          %s137 = ssub.s32 16, 16
          %138 = vsyncadd [#allocation5], %s137
          %141 = dma.hbm_to_smem %s0, 16, [#allocation2], [#allocation5]
        $region16: #{tpu_custom_call.1} parent=11 // pred_fallthru
          _
      $region12: #{tpu_custom_call.1} parent=5 // pred_fallthru
        _
      %p142 = scmp.lt.s32.totalorder %s19, 2
      // Predicated region
      $region17: #{tpu_custom_call.1} parent=5 // pred_check
        %p143 = pneg %p142
      $region18: #{tpu_custom_call.1} parent=5 // pred_check_branch
        %145 = sbr.rel (%p143) target = $region20
      $region19: #{tpu_custom_call.1} parent=5 // pred_region
        // Predicated region
        $region21: #{tpu_custom_call.1} parent=19 // pred_check
          %p146 = pneg %p60
        $region22: #{tpu_custom_call.1} parent=19 // pred_check_branch
          %148 = sbr.rel (%p146) target = $region24
        $region23: #{tpu_custom_call.1} parent=19 // pred_region
          %s149 = sand.u32 %s50, 1
          %s150 = scalar_lea.sflag [#allocation3], %s149
          %s151 = sand.u32 %s50, 1
          %s152 = smul.addr %s151, 8
          %s153 = scalar_lea.vmem [#allocation6], %s152
          %s155 = ssub.s32 128, 128
          %156 = vsyncadd %s150, %s155
          %s157 = smul.addr %s19, 128
          %s158 = scalar_lea.hbm %s1, %s157
          %s160 = sshll.u32 %s153, 4
          %s161 = int_to_ptr.vmem [resolvable:$true] %s160
          %163 = dma.hbm_to_vmem [thread:$0]  %s158, 128, %s161, %s150
        $region24: #{tpu_custom_call.1} parent=19 // pred_fallthru
          _
        // Predicated region
        $region25: #{tpu_custom_call.1} parent=19 // pred_check
          %p164 = pneg %p86
        $region26: #{tpu_custom_call.1} parent=19 // pred_check_branch
          %166 = sbr.rel (%p164) target = $region28
        $region27: #{tpu_custom_call.1} parent=19 // pred_region
          %s167 = sand.u32 %s76, 1
          %s168 = scalar_lea.sflag [#allocation8], %s167
          %s169 = sand.u32 %s76, 1
          %s170 = smul.addr %s169, 8
          %s171 = scalar_lea.vmem [#allocation7], %s170
          %s173 = ssub.s32 128, 128
          %174 = vsyncadd %s168, %s173
          %s175 = smul.addr %s19, 128
          %s176 = scalar_lea.hbm %s2, %s175
          %s178 = sshll.u32 %s171, 4
          %s179 = int_to_ptr.vmem [resolvable:$true] %s178
          %181 = dma.hbm_to_vmem [thread:$0]  %s176, 128, %s179, %s168
        $region28: #{tpu_custom_call.1} parent=19 // pred_fallthru
          _
      $region20: #{tpu_custom_call.1} parent=5 // pred_fallthru
        _
      %p182 = scmp.le.s32.totalorder 1, %s19
      %p183 = scmp.lt.s32.totalorder %s19, 3
      %p184 = pnand %p182, %p183
      %p185 = pneg %p184
      // Predicated region
      $region29: #{tpu_custom_call.1} parent=5 // pred_check
        _
      $region30: #{tpu_custom_call.1} parent=5 // pred_check_branch
        %187 = sbr.rel (%p184) target = $region32
      $region31: #{tpu_custom_call.1} parent=5 // pred_region
        %s188 = ssub.s32 %s19, 1
        // Predicated region
        $region33: #{tpu_custom_call.1} parent=31 // pred_check
          %p189 = pneg %p40
        $region34: #{tpu_custom_call.1} parent=31 // pred_check_branch
          %191 = sbr.rel (%p189) target = $region36
        $region35: #{tpu_custom_call.1} parent=31 // pred_region
          %192 = dma.done [#allocation5], 16
        $region36: #{tpu_custom_call.1} parent=31 // pred_fallthru
          _
        %s193 = sand.u32 %s53, 1
        %s194 = scalar_lea.sflag [#allocation3], %s193
        %s195 = sand.u32 %s53, 1
        %s196 = smul.addr %s195, 8
        %s197 = scalar_lea.vmem [#allocation6], %s196
        // Predicated region
        $region37: #{tpu_custom_call.1} parent=31 // pred_check
          %p198 = pneg %p66
        $region38: #{tpu_custom_call.1} parent=31 // pred_check_branch
          %200 = sbr.rel (%p198) target = $region40
        $region39: #{tpu_custom_call.1} parent=31 // pred_region
          %201 = dma.done %s194, 128
        $region40: #{tpu_custom_call.1} parent=31 // pred_fallthru
          _
        %s202 = sand.u32 %s79, 1
        %s203 = scalar_lea.sflag [#allocation8], %s202
        %s204 = sand.u32 %s79, 1
        %s205 = smul.addr %s204, 8
        %s206 = scalar_lea.vmem [#allocation7], %s205
        // Predicated region
        $region41: #{tpu_custom_call.1} parent=31 // pred_check
          %p207 = pneg %p92
        $region42: #{tpu_custom_call.1} parent=31 // pred_check_branch
          %209 = sbr.rel (%p207) target = $region44
        $region43: #{tpu_custom_call.1} parent=31 // pred_region
          %210 = dma.done %s203, 128
        $region44: #{tpu_custom_call.1} parent=31 // pred_fallthru
          _
        %211 = sfence
        %p212 = pneg %p40
        %p213 = pneg %p37
        %s214 = sand.u32 %s53, 1
        %s215 = scalar_lea.sflag [#allocation3], %s214
        %s216 = sand.u32 %s53, 1
        %s217 = smul.addr %s216, 8
        %s218 = scalar_lea.vmem [#allocation6], %s217
        %p219 = pneg %p66
        %p220 = pneg %p63
        %s221 = sand.u32 %s79, 1
        %s222 = scalar_lea.sflag [#allocation8], %s221
        %s223 = sand.u32 %s79, 1
        %s224 = smul.addr %s223, 8
        %s225 = scalar_lea.vmem [#allocation7], %s224
        %p226 = pneg %p92
        %p227 = pneg %p89
        %p228 = pneg %p118
        %p229 = pneg %p115
        %s230 = sand.u32 %s105, 1
        %s231 = scalar_lea.sflag [#allocation4], %s230
        %s232 = sand.u32 %s105, 1
        %s233 = smul.addr %s232, 8
        %s234 = scalar_lea.vmem [#allocation9], %s233
        %s235 = sld [smem:[#allocation2]]
        %s236 = sld [smem:[#allocation2 + $0x1]]
        %v237 = vld [vmem:[%s197] sm:$0xff]
        %v238 = vmul.f32 %v237, %v237
        %239 = vadd.xlane.f32.xlu0 %v238
        %v240 = vpop.xlane.xlu0 %239
        %v241 = vrot.slane %v240, 4
        %v242 = vadd.f32 %v240, %v241
        %v243 = vrot.slane %v242, 2
        %v244 = vadd.f32 %v242, %v243
        %v245 = vrot.slane %v244, 1
        %v246 = vadd.f32 %v244, %v245
        %v247 = vstv %s236
        %v248 = vmul.f32 %v246, %v247
        %v249 = vstv %s235
        %v250 = vmul.f32 %v248, %v249
        %v251 = vrsqrt.pop %v250
        %v252 = vmul.f32 %v250, %v251
        %vm253 = vcmp.eq.f32.partialorder %v250, inf
        %v254 = vsel %vm253, %v250, %v252
        %vm255 = vcmp.eq.f32.partialorder %v250, 0.0
        %v256 = vand.u32 %v250, 2147483648
        %v257 = vsel %vm255, %v256, %v254
        %v258 = vld [vmem:[%s206] sm:$0xff]
        %v259 = vmul.f32 %v258, %v257
        %v260 = vadd.f32 %v237, %v259
        %261 = vst [vmem:[%s234] sm:$0xff] %v260
        %s262 = sand.u32 %s105, 1
        %s263 = scalar_lea.sflag [#allocation4], %s262
        %s264 = sand.u32 %s105, 1
        %s265 = smul.addr %s264, 8
        %s266 = scalar_lea.vmem [#allocation9], %s265
        // Predicated region
        $region45: #{tpu_custom_call.1} parent=31 // pred_check
          %p267 = pneg %p115
        $region46: #{tpu_custom_call.1} parent=31 // pred_check_branch
          %269 = sbr.rel (%p267) target = $region48
        $region47: #{tpu_custom_call.1} parent=31 // pred_region
          %s271 = ssub.s32 128, 128
          %272 = vsyncadd %s263, %s271
          %s273 = smul.addr %s24, 128
          %s274 = scalar_lea.hbm %s3, %s273
          %s276 = sshll.u32 %s266, 4
          %s277 = int_to_ptr.vmem [resolvable:$true] %s276
          %279 = dma.vmem_to_hbm [thread:$0]  %s277, 128, %s274, %s263
        $region48: #{tpu_custom_call.1} parent=31 // pred_fallthru
          _
      $region32: #{tpu_custom_call.1} parent=5 // pred_fallthru
        _
      %p280 = scmp.le.s32.totalorder 2, %s19
      // Predicated region
      $region49: #{tpu_custom_call.1} parent=5 // pred_check
        %p281 = pneg %p280
      $region50: #{tpu_custom_call.1} parent=5 // pred_check_branch
        %283 = sbr.rel (%p281) target = $region52
      $region51: #{tpu_custom_call.1} parent=5 // pred_region
        %s284 = ssub.s32 %s19, 2
        // Predicated region
        $region53: #{tpu_custom_call.1} parent=51 // pred_check
          %p285 = pneg %p121
        $region54: #{tpu_custom_call.1} parent=51 // pred_check_branch
          %287 = sbr.rel (%p285) target = $region56
        $region55: #{tpu_custom_call.1} parent=51 // pred_region
          %s288 = sand.u32 %s106, 1
          %s289 = scalar_lea.sflag [#allocation4], %s288
          %s290 = sand.u32 %s106, 1
          %s291 = smul.addr %s290, 8
          %s292 = scalar_lea.vmem [#allocation9], %s291
          %293 = dma.done %s289, 128
        $region56: #{tpu_custom_call.1} parent=51 // pred_fallthru
          _
      $region52: #{tpu_custom_call.1} parent=5 // pred_fallthru
        _
    $region6: #{tpu_custom_call.1} parent=1 // loop_footer
      %s23 = sadd.s32 1, %s19
    $region7: #{tpu_custom_call.1} parent=1 // loop_footer_branch
      %18 = sbr.rel target = $region3
    $region8: #{tpu_custom_call.1} parent=1 // loop_exit
      _
    %294 = vsyncpa [#allocation3], 1
    %s295 = scalar_lea.sflag [#allocation3], 1
    %296 = vsyncpa %s295, 1
    %297 = vsyncpa [#allocation8], 1
    %s298 = scalar_lea.sflag [#allocation8], 1
    %299 = vsyncpa %s298, 1
    %300 = vsyncpa [#allocation4], 1
    %s301 = scalar_lea.sflag [#allocation4], 1
    %302 = vsyncpa %s301, 1
    %303 = vsyncpa [#allocation5], 1
    %s304 = scalar_lea.sflag [#allocation5], 1
    %305 = vsyncpa %s304, 1

</llo_original>
